<compile_context>
chip_gen: v6e
topology: v6e:2x2x1
jax: 0.10.0
libtpu: 0.0.40
codegen_flags: <defaults>
</compile_context>

<pallas_src>
import jax
import jax.numpy as jnp
from jax.experimental import pallas as pl
from jax.experimental.pallas import tpu as pltpu

LANES = 128
MAX_TILE_ROWS = 1024  # 1024*128*4B = 512 KiB/buffer; well under all VMEM budgets


def _square_scale_kernel(alpha_ref, x_ref, o_ref):
    # alpha_ref: SMEM scalar (shape (1,)); x_ref/o_ref: (TILE_R, 128) VMEM tiles.
    a = alpha_ref[0]          # single scalar load, hoisted by the compiler
    x = x_ref[...]
    o_ref[...] = (x * x) * a  # pure VALU work; memory-bound kernel


def mynet_forward(x, alpha1):
    """x: (B, C, H, W) float32, alpha1: shape (1,) float32 parameter."""
    orig_shape = x.shape
    total = x.size

    # Lane-dense layout: rows of 128 lanes.
    n_rows = pl.cdiv(total, LANES)
    # Tile rows: multiple of 8 (sublane constraint), capped at MAX_TILE_ROWS.
    tile_r = min(MAX_TILE_ROWS, ((n_rows + 7) // 8) * 8)
    n_blocks = pl.cdiv(n_rows, tile_r)
    padded_rows = n_blocks * tile_r
    padded_total = padded_rows * LANES

    xf = x.reshape(-1)
    if padded_total != total:
        xf = jnp.pad(xf, (0, padded_total - total))
    x2d = xf.reshape(padded_rows, LANES)

    alpha1 = alpha1.reshape(1).astype(x2d.dtype)

    out2d = pl.pallas_call(
        _square_scale_kernel,
        out_shape=jax.ShapeDtypeStruct(x2d.shape, x2d.dtype),
        grid_spec=pltpu.PrefetchScalarGridSpec(
            num_scalar_prefetch=0,
            grid=(n_blocks,),
            in_specs=[
                pl.BlockSpec(memory_space=pltpu.SMEM),            # alpha1 scalar
                pl.BlockSpec((tile_r, LANES), lambda i: (i, 0)),  # input tile
            ],
            out_specs=pl.BlockSpec((tile_r, LANES), lambda i: (i, 0)),
        ),
        compiler_params=pltpu.CompilerParams(
            dimension_semantics=("parallel",),
        ),
        cost_estimate=pl.CostEstimate(
            flops=2 * total, transcendentals=0, bytes_accessed=8 * total
        ),
    )(alpha1, x2d)

    return out2d.reshape(-1)[:total].reshape(orig_shape)


if __name__ == "__main__":
    key = jax.random.PRNGKey(0)
    k_x, k_alpha = jax.random.split(key)

    # Small NCHW input consistent with the module's elementwise forward.
    x = jax.random.normal(k_x, (2, 4, 16, 16), dtype=jnp.float32)
    # MyLayer.alpha1: Parameter of shape (1,); reset_parameters uses uniform(0, 1).
    alpha1 = jax.random.uniform(k_alpha, (1,), dtype=jnp.float32, minval=0.0, maxval=1.0)

    y = mynet_forward(x, alpha1)
    jax.block_until_ready(y)

    # Reference check against plain JAX semantics of the PyTorch forward.
    y_ref = (x ** 2) * alpha1[0]
    assert y.shape == x.shape
    assert jnp.allclose(y, y_ref, atol=1e-6, rtol=1e-6)

    print("KERNEL_OK")
</pallas_src>

<mosaic_0001>
module attributes {stable_mosaic.version = 11 : i64} {
  func.func @_square_scale_kernel(%arg0: i32, %arg1: memref<1xf32, #tpu.memory_space<smem>>, %arg2: memref<16x128xf32, #tpu.memory_space<vmem>>, %arg3: memref<16x128xf32, #tpu.memory_space<vmem>>) attributes {dimension_semantics = [#tpu.dimension_semantics<parallel>], iteration_bounds = array<i64: 1>, scalar_prefetch = 0 : i64, scratch_operands = 0 : i64, tpu.core_type = #tpu.core_type<tc>, window_params = [{transform_indices = @transform_0, window_bounds = array<i64: 1>}, {transform_indices = @transform_1, window_bounds = array<i64: 16, 128>}, {transform_indices = @transform_2, window_bounds = array<i64: 16, 128>}]} {
    %c0 = arith.constant 0 : index
    %0 = memref.load %arg1[%c0] : memref<1xf32, #tpu.memory_space<smem>>
    %c0_0 = arith.constant 0 : index
    %c0_1 = arith.constant 0 : index
    %1 = vector.load %arg2[%c0_0, %c0_1] : memref<16x128xf32, #tpu.memory_space<vmem>>, vector<16x128xf32>
    %2 = arith.mulf %1, %1 : vector<16x128xf32>
    %3 = vector.broadcast %0 : f32 to vector<16x128xf32>
    %4 = arith.mulf %2, %3 : vector<16x128xf32>
    %c0_2 = arith.constant 0 : index
    %c0_3 = arith.constant 0 : index
    %5 = vector.load %arg3[%c0_2, %c0_3] : memref<16x128xf32, #tpu.memory_space<vmem>>, vector<16x128xf32>
    tpu.vector_store %arg3[%c0_2, %c0_3], %4 {strides = array<i32>} : memref<16x128xf32, #tpu.memory_space<vmem>>, vector<16x128xf32>,
    return
  }
  func.func @transform_0(%arg0: i32) -> i32 {
    %c0_i32 = arith.constant 0 : i32
    %c0_i32_0 = arith.constant 0 : i32
    return %c0_i32 : i32
  }
  func.func @transform_1(%arg0: i32) -> (i32, i32) {
    %c0_i32 = arith.constant 0 : i32
    %c0_i32_0 = arith.constant 0 : i32
    return %arg0, %c0_i32 : i32, i32
  }
  func.func @transform_2(%arg0: i32) -> (i32, i32) {
    %c0_i32 = arith.constant 0 : i32
    %c0_i32_0 = arith.constant 0 : i32
    return %arg0, %c0_i32 : i32, i32
  }
}

</mosaic_0001>

<llo_original>
// kernel: tpu_custom_call.1
$region0: #{tpu_custom_call.1}
  #allocation0 [shape = 'u32[]', space=smem, size = 0x4, offset = 0x4, fixed_abs, tag = 'smem constant byte address 0x4 - core index']
  #allocation1 [shape = 'u32[144,128]{1,0:T(1,128)}', space=vmem, size = 0x12000, scoped, tag = 'internal scratch']
  #allocation2 [shape = 'f32[1]{0:T(128)S(6)}', space=smem, size = 0x200, scoped, tag = 'scoped memory for tpu_custom_call.1']
  %s0 = inlined_call_operand.<no memory space> [shape: f32[1], index: 0, kind: input, shape index: {}]
  %s1 = inlined_call_operand.hbm [shape: f32[16,128], index: 1, kind: input, shape index: {}]
  %s2 = inlined_call_operand.hbm [shape: f32[16,128], index: 2, kind: output, shape index: {}]
  %s3 = sld [smem:[#allocation0]]
  $region22: #{tpu_custom_call.1} parent=0
    _
  %s5 = ssub.s32 1, %s3
  %s6 = scalar_select 0, %s5, %s3
  %7 = sst [smem:[#allocation2]] %s0
  $region1: #{tpu_custom_call.1} parent=0
    #allocation3 [shape = 'u8[8192]{0}', space=vmem, size = 0x2000, scoped, tag = 'input window, operand 1, single buffered']
    #allocation4 [shape = 's32[1]{0}', space=sflag, size = 0x4, scoped, tag = 'scoped memory for tpu_custom_call.1']
    #allocation5 [shape = 's32[1]{0}', space=sflag, size = 0x4, scoped, tag = 'scoped memory for tpu_custom_call.1']
    #allocation6 [shape = 'u8[8192]{0}', space=vmem, size = 0x2000, scoped, tag = 'output window, operand 0, single buffered']
    %8 = vsyncpa [#allocation4], 0
    %9 = vsyncpa [#allocation5], 0
    // Predicated region
    $region2: #{tpu_custom_call.1} parent=1 // pred_check
      _
    $region3: #{tpu_custom_call.1} parent=1 // pred_check_branch
      %11 = sbr.rel (0) target = $region5
    $region4: #{tpu_custom_call.1} parent=1 // pred_region
      _
    $region5: #{tpu_custom_call.1} parent=1 // pred_fallthru
      _
    // Predicated region
    $region6: #{tpu_custom_call.1} parent=1 // pred_check
      _
    $region7: #{tpu_custom_call.1} parent=1 // pred_check_branch
      %13 = sbr.rel (0) target = $region9
    $region8: #{tpu_custom_call.1} parent=1 // pred_region
      %s15 = ssub.s32 256, 256
      %16 = vsyncadd [#allocation4], %s15
      %s17 = sshll.u32 [#allocation3], 4
      %s18 = int_to_ptr.vmem [resolvable:$true] %s17
      %23 = dma.hbm_to_vmem [thread:$0]  %s1, 256, %s18, [#allocation4], 128, 128, 8
    $region9: #{tpu_custom_call.1} parent=1 // pred_fallthru
      _
    // Predicated region
    $region10: #{tpu_custom_call.1} parent=1 // pred_check
      _
    $region11: #{tpu_custom_call.1} parent=1 // pred_check_branch
      %25 = sbr.rel (0) target = $region13
    $region12: #{tpu_custom_call.1} parent=1 // pred_region
      %26 = dma.done [#allocation4], 256
    $region13: #{tpu_custom_call.1} parent=1 // pred_fallthru
      _
    %s27 = sld [smem:[#allocation2]]
    %v28 = vld [vmem:[#allocation3] sm:$0xff]
    %v29 = vld [vmem:[#allocation3 + $0x8] sm:$0xff]
    %v30 = vmul.f32 %v28, %v28
    %v31 = vmul.f32 %v29, %v29
    %v32 = vstv %s27
    %v33 = vmul.f32 %v30, %v32
    %v34 = vmul.f32 %v31, %v32
    %35 = vst [vmem:[#allocation6] sm:$0xff] %v33
    %36 = vst [vmem:[#allocation6 + $0x8] sm:$0xff] %v34
    // Predicated region
    $region14: #{tpu_custom_call.1} parent=1 // pred_check
      _
    $region15: #{tpu_custom_call.1} parent=1 // pred_check_branch
      %38 = sbr.rel (0) target = $region17
    $region16: #{tpu_custom_call.1} parent=1 // pred_region
      %s40 = ssub.s32 256, 256
      %41 = vsyncadd [#allocation5], %s40
      %s42 = sshll.u32 [#allocation6], 4
      %s43 = int_to_ptr.vmem [resolvable:$true] %s42
      %48 = dma.vmem_to_hbm [thread:$0]  %s43, 256, %s2, [#allocation5], 128, 128, 8
    $region17: #{tpu_custom_call.1} parent=1 // pred_fallthru
      _
    // Predicated region
    $region18: #{tpu_custom_call.1} parent=1 // pred_check
      _
    $region19: #{tpu_custom_call.1} parent=1 // pred_check_branch
      %50 = sbr.rel (0) target = $region21
    $region20: #{tpu_custom_call.1} parent=1 // pred_region
      %51 = dma.done [#allocation5], 256
    $region21: #{tpu_custom_call.1} parent=1 // pred_fallthru
      _
    %52 = vsyncpa [#allocation4], 1
    %53 = vsyncpa [#allocation5], 1

</llo_original>
